<compile_context>
chip_gen: v7x
topology: tpu7x:2x2x1
jax: 0.10.0
libtpu: 0.0.40
codegen_flags: <defaults>
</compile_context>

<pallas_src>
import jax
import jax.numpy as jnp
from jax.experimental import pallas as pl
from jax.experimental.pallas import tpu as pltpu

_LANE = 128
_TARGET_BLOCK_BYTES = 6 * 1024 * 1024   # per-operand block (lane-padded VMEM bytes)
_MIN_SPLIT_BYTES = 1 * 1024 * 1024      # below this keep a single resident block
_VMEM_LIMIT_BYTES = 40 * 1024 * 1024    # 2 operands x 2 buffers x ~6 MiB + headroom


def _not_gate_kernel(x_ref, o_ref):
    # NOT gate forward: 1 - x (pure VPU elementwise; kernel is HBM-bound).
    o_ref[...] = (1 - x_ref[...]).astype(o_ref.dtype)


def _round_up(v: int, m: int) -> int:
    return -(-v // m) * m


def _pick_row_tile(rows: int, bytes_per_row: int, sublane: int):
    """Pick (rows_per_block, grid_steps) for a (rows, cols) slab.

    `bytes_per_row` is the lane-padded VMEM footprint of one row.  Targets
    ~6 MiB per block and an even number of near-equal blocks (v7x two-TC
    balance).  Tiny slabs (< 1 MiB) stay a single block so single-TC chips
    don't pay an extra ~0.35 us grid step for nothing.
    """
    target_rows = max(sublane, _TARGET_BLOCK_BYTES // bytes_per_row)
    total_bytes = rows * bytes_per_row
    if rows <= target_rows and total_bytes < _MIN_SPLIT_BYTES:
        return rows, 1
    n_blocks = 2 * max(1, pl.cdiv(rows, 2 * target_rows))   # even block count
    tr = _round_up(pl.cdiv(rows, n_blocks), sublane)
    if tr >= rows:
        return rows, 1
    return tr, pl.cdiv(rows, tr)


def _run(x2d: jax.Array, tr: int, grid: int, n_elems: int, itemsize: int) -> jax.Array:
    rows, cols = x2d.shape
    return pl.pallas_call(
        _not_gate_kernel,
        out_shape=jax.ShapeDtypeStruct((rows, cols), x2d.dtype),
        grid_spec=pltpu.PrefetchScalarGridSpec(
            num_scalar_prefetch=0,
            grid=(grid,),
            in_specs=[pl.BlockSpec((tr, cols), lambda i: (i, 0))],
            out_specs=pl.BlockSpec((tr, cols), lambda i: (i, 0)),
        ),
        compiler_params=pltpu.CompilerParams(
            dimension_semantics=("parallel",),
            vmem_limit_bytes=_VMEM_LIMIT_BYTES,
        ),
        cost_estimate=pl.CostEstimate(
            flops=n_elems,
            transcendentals=0,
            bytes_accessed=2 * n_elems * itemsize,
        ),
    )(x2d)


def not_gate_forward(x: jax.Array) -> jax.Array:
    """Pallas implementation of NotGate.forward: 1 - x."""
    orig_shape = x.shape
    n = x.size
    if n == 0:
        return 1 - x  # nothing to launch

    # Matches `1 - x` for float/int inputs in [0, 1] (the module's contract).
    # Bool inputs are rejected by torch's `1 - x` as well, so not handled here.
    dtype = x.dtype
    itemsize = jnp.dtype(dtype).itemsize
    sublane = max(8, 32 // itemsize)   # native sublane tile: 8 f32 / 16 bf16 / 32 i8

    if n % _LANE == 0:
        # Common NN case: free contiguous reshape to a lane-dense (rows, 128)
        # slab -> unmasked 128-wide stores, zero wrapper copies.
        cols = _LANE
        x2d = x.reshape(n // _LANE, _LANE)
    else:
        # Unaligned size: keep the natural minor dim as the (full) lane block
        # so the reshape stays a free bitcast.  Pallas masks the boundary DMAs,
        # so HBM traffic stays at 2n (no jnp.pad / output slice copies).
        cols = orig_shape[-1] if x.ndim >= 1 else 1
        x2d = x.reshape(n // cols, cols)

    rows = x2d.shape[0]
    bytes_per_row = _round_up(cols, _LANE) * itemsize   # lane-padded VMEM footprint

    if bytes_per_row > _TARGET_BLOCK_BYTES:
        # Pathological: one unaligned row alone exceeds the block budget.
        # TODO(synk): replace this rare jnp.pad fallback with a manual-DMA
        # masked-tail kernel; it costs ~3x HBM traffic but stays correct.
        pad_tail = _round_up(n, _LANE) - n
        x2d = jnp.pad(x.reshape(-1), (0, pad_tail)).reshape(-1, _LANE)
        rows = x2d.shape[0]
        tr, grid = _pick_row_tile(rows, _LANE * itemsize, sublane)
        out2d = _run(x2d, tr, grid, rows * _LANE, itemsize)
        return out2d.reshape(-1)[:n].reshape(orig_shape)

    tr, grid = _pick_row_tile(rows, bytes_per_row, sublane)
    out2d = _run(x2d, tr, grid, n, itemsize)
    return out2d.reshape(orig_shape)


if __name__ == "__main__":
    key = jax.random.PRNGKey(0)
    k1, k2, k3, k4 = jax.random.split(key, 4)

    # NotGate.validate expects inputs in [0, 1]; use uniform draws.
    # Primary small NCHW input (single-block path).
    x = jax.random.uniform(k1, (2, 4, 16, 16), dtype=jnp.float32)
    out = not_gate_forward(x)
    jax.block_until_ready(out)
    ref = 1 - x
    assert out.shape == ref.shape
    assert jnp.allclose(out, ref, atol=1e-6, rtol=1e-6)

    # Exercise the multi-block, even-grid (two-TC balanced) path: 2 MiB slab.
    x_big = jax.random.uniform(k2, (8, 8, 64, 128), dtype=jnp.float32)
    out_big = not_gate_forward(x_big)
    jax.block_until_ready(out_big)
    assert jnp.allclose(out_big, 1 - x_big, atol=1e-6, rtol=1e-6)

    # Exercise the non-multiple-of-128, single-block path (no pad, no slice).
    x_odd = jax.random.uniform(k3, (3, 5, 7), dtype=jnp.float32)
    out_odd = not_gate_forward(x_odd)
    jax.block_until_ready(out_odd)
    assert out_odd.shape == x_odd.shape
    assert jnp.allclose(out_odd, 1 - x_odd, atol=1e-6, rtol=1e-6)

    # Exercise the non-multiple-of-128, multi-block path with a partial
    # boundary block along the row dimension.
    x_tail = jax.random.uniform(k4, (3000, 100), dtype=jnp.float32)
    out_tail = not_gate_forward(x_tail)
    jax.block_until_ready(out_tail)
    assert out_tail.shape == x_tail.shape
    assert jnp.allclose(out_tail, 1 - x_tail, atol=1e-6, rtol=1e-6)

    print("KERNEL_OK")
</pallas_src>

<mosaic_0001>
module attributes {stable_mosaic.version = 11 : i64} {
  func.func @_not_gate_kernel(%arg0: i32, %arg1: memref<16x128xf32, #tpu.memory_space<vmem>>, %arg2: memref<16x128xf32, #tpu.memory_space<vmem>>) attributes {dimension_semantics = [#tpu.dimension_semantics<parallel>], iteration_bounds = array<i64: 1>, scalar_prefetch = 0 : i64, scratch_operands = 0 : i64, tpu.core_type = #tpu.core_type<tc>, window_params = [{transform_indices = @transform_0, window_bounds = array<i64: 16, 128>}, {transform_indices = @transform_1, window_bounds = array<i64: 16, 128>}]} {
    %c0 = arith.constant 0 : index
    %c0_0 = arith.constant 0 : index
    %0 = vector.load %arg1[%c0, %c0_0] : memref<16x128xf32, #tpu.memory_space<vmem>>, vector<16x128xf32>
    %cst = arith.constant 1.000000e+00 : f32
    %1 = vector.broadcast %cst : f32 to vector<16x128xf32>
    %2 = arith.subf %1, %0 : vector<16x128xf32>
    %c0_1 = arith.constant 0 : index
    %c0_2 = arith.constant 0 : index
    %3 = vector.load %arg2[%c0_1, %c0_2] : memref<16x128xf32, #tpu.memory_space<vmem>>, vector<16x128xf32>
    tpu.vector_store %arg2[%c0_1, %c0_2], %2 {strides = array<i32>} : memref<16x128xf32, #tpu.memory_space<vmem>>, vector<16x128xf32>,
    return
  }
  func.func @transform_0(%arg0: i32) -> (i32, i32) {
    %c0_i32 = arith.constant 0 : i32
    %c0_i32_0 = arith.constant 0 : i32
    return %arg0, %c0_i32 : i32, i32
  }
  func.func @transform_1(%arg0: i32) -> (i32, i32) {
    %c0_i32 = arith.constant 0 : i32
    %c0_i32_0 = arith.constant 0 : i32
    return %arg0, %c0_i32 : i32, i32
  }
}

</mosaic_0001>

<llo_original>
// kernel: tpu_custom_call.1
$region0: #{tpu_custom_call.1}
  #allocation0 [shape = 'u32[]', space=smem, size = 0x4, offset = 0x4, fixed_abs, tag = 'smem constant byte address 0x4 - core index']
  #allocation1 [shape = 'u32[144,128]{1,0:T(1,128)}', space=vmem, size = 0x12000, scoped, tag = 'internal scratch']
  %s0 = inlined_call_operand.hbm [shape: f32[16,128], index: 0, kind: input, shape index: {}]
  %s1 = inlined_call_operand.hbm [shape: f32[16,128], index: 1, kind: output, shape index: {}]
  %s2 = sld [smem:[#allocation0]]
  $region18: #{tpu_custom_call.1} parent=0
    _
  %s4 = ssub.s32 1, %s2
  %s5 = scalar_select 0, %s4, %s2
  $region1: #{tpu_custom_call.1} parent=0
    #allocation2 [shape = 'u8[8192]{0}', space=vmem, size = 0x2000, scoped, tag = 'input window, operand 0, single buffered']
    #allocation3 [shape = 's32[1]{0}', space=sflag, size = 0x4, scoped, tag = 'scoped memory for tpu_custom_call.1']
    #allocation4 [shape = 's32[1]{0}', space=sflag, size = 0x4, scoped, tag = 'scoped memory for tpu_custom_call.1']
    #allocation5 [shape = 'u8[8192]{0}', space=vmem, size = 0x2000, scoped, tag = 'output window, operand 0, single buffered']
    %6 = vsyncpa [#allocation3], 0
    %7 = vsyncpa [#allocation4], 0
    // Predicated region
    $region2: #{tpu_custom_call.1} parent=1 // pred_check
      _
    $region3: #{tpu_custom_call.1} parent=1 // pred_check_branch
      %9 = sbr.rel (0) target = $region5
    $region4: #{tpu_custom_call.1} parent=1 // pred_region
      %s11 = ssub.s32 256, 256
      %12 = vsyncadd [#allocation3], %s11
      %s13 = sshll.u32 [#allocation2], 4
      %s14 = int_to_ptr.vmem [resolvable:$true] %s13
      %19 = dma.hbm_to_vmem [thread:$0]  %s0, 256, %s14, [#allocation3], 128, 128, 8
    $region5: #{tpu_custom_call.1} parent=1 // pred_fallthru
      _
    // Predicated region
    $region6: #{tpu_custom_call.1} parent=1 // pred_check
      _
    $region7: #{tpu_custom_call.1} parent=1 // pred_check_branch
      %21 = sbr.rel (0) target = $region9
    $region8: #{tpu_custom_call.1} parent=1 // pred_region
      %22 = dma.done [#allocation3], 256
    $region9: #{tpu_custom_call.1} parent=1 // pred_fallthru
      _
    %v23 = vld [vmem:[#allocation2] sm:$0xff]
    %v24 = vld [vmem:[#allocation2 + $0x8] sm:$0xff]
    %v25 = vsub.f32 1.0, %v23
    %v26 = vsub.f32 1.0, %v24
    %27 = vst [vmem:[#allocation5] sm:$0xff] %v25
    %28 = vst [vmem:[#allocation5 + $0x8] sm:$0xff] %v26
    // Predicated region
    $region10: #{tpu_custom_call.1} parent=1 // pred_check
      _
    $region11: #{tpu_custom_call.1} parent=1 // pred_check_branch
      %30 = sbr.rel (0) target = $region13
    $region12: #{tpu_custom_call.1} parent=1 // pred_region
      %s32 = ssub.s32 256, 256
      %33 = vsyncadd [#allocation4], %s32
      %s34 = sshll.u32 [#allocation5], 4
      %s35 = int_to_ptr.vmem [resolvable:$true] %s34
      %40 = dma.vmem_to_hbm [thread:$0]  %s35, 256, %s1, [#allocation4], 128, 128, 8
    $region13: #{tpu_custom_call.1} parent=1 // pred_fallthru
      _
    // Predicated region
    $region14: #{tpu_custom_call.1} parent=1 // pred_check
      _
    $region15: #{tpu_custom_call.1} parent=1 // pred_check_branch
      %42 = sbr.rel (0) target = $region17
    $region16: #{tpu_custom_call.1} parent=1 // pred_region
      %43 = dma.done [#allocation4], 256
    $region17: #{tpu_custom_call.1} parent=1 // pred_fallthru
      _
    %44 = vsyncpa [#allocation3], 1
    %45 = vsyncpa [#allocation4], 1

</llo_original>
